<compile_context>
chip_gen: v7x
topology: tpu7x:2x2x1
jax: 0.10.0
libtpu: 0.0.40
codegen_flags: <defaults>
</compile_context>

<pallas_src>
import functools

import jax
import jax.numpy as jnp
from jax.experimental import pallas as pl
from jax.experimental.pallas import tpu as pltpu


# ------------------------------ model config ---------------------------------
IN_CH = 2        # (f0, vuv)
HID = 32         # encoder hidden channels
LAT = 16         # latent dim of the 1x1 projection
CODES = 64       # VQ codebook size
KSZ = 4          # conv kernel size
STRIDE = 2
PAD = 1

# ------------------- packed parameter-slab row layout ------------------------
# One f32 slab of shape (_SLAB_ROWS, _SLAB_LANES); every section starts at an
# 8-row (sublane-tile) aligned offset so in-kernel static slices stay cheap.
_SLAB_LANES = max(HID, CODES)            # 64
_R_W1 = 0                                # (KSZ*IN_CH, HID)  rows 0..7
_R_B1 = 8                                # (1, HID)          row 8
_R_W2 = 16                               # (KSZ*HID, HID)    rows 16..143
_R_B2 = 144                              # (1, HID)          row 144
_R_A = 152                               # (HID, CODES)      rows 152..183
_R_D0 = 184                              # (1, CODES)        row 184
_SLAB_ROWS = 192

_H1_OFF = 8                              # 8-row aligned lead-in in the h1 scratch


# ------------------------------ fused Pallas kernel ---------------------------

def _f0_vqvae_fused_kernel(x_ref, p_ref, codes_ref, xn_ref, h1p_ref):
    """norm -> conv1(k4,s2,p1)+ReLU -> conv2(k4,s2,p1)+ReLU -> folded
    (1x1 proj + VQ nearest-code).  Everything stays in VMEM / vregs."""
    Tpad = x_ref.shape[0]                 # T + 2 (already zero-padded by 1 frame/side)
    T1 = (Tpad - 2) // 2                  # frames after conv1
    T2 = T1 // 2                          # frames after conv2

    # --- speaker-mean normalization (speaker=None, norm_* features) ----------
    #   mean = torch.mean(f0[vuv != 0]); f0[f0 != 0] -= mean
    # Padding frames have f0 = vuv = 0, so they affect neither the mean nor
    # the normalization.  mean is NaN when there is no voiced frame (same as
    # torch.mean of an empty tensor) -- degenerate-input behavior differs.
    x = x_ref[...]                        # (T+2, 2): lane 0 = f0, lane 1 = vuv
    f0 = x[:, 0:1]
    vuv = x[:, 1:2]
    voiced = vuv != 0.0
    cnt = jnp.sum(voiced.astype(jnp.float32))
    mean = jnp.sum(jnp.where(voiced, f0, 0.0)) / cnt
    lane = jax.lax.broadcasted_iota(jnp.int32, x.shape, 1)
    xn = jnp.where(jnp.logical_and(lane == 0, x != 0.0), x - mean, x)
    xn_ref[...] = xn                      # scratch, so conv1 can strided-load it

    # --- conv1: Conv1d(2 -> H, k=4, s=2, p=1) + ReLU --------------------------
    # Output frame t uses padded rows 2t+k; tap k is a stride-2 sublane load.
    # im2col lane order is (f0_k, vuv_k) i.e. lane 2k+ch, matching w1's rows.
    w1 = p_ref[_R_W1:_R_W1 + KSZ * IN_CH, 0:HID]          # (8, H)
    b1 = p_ref[_R_B1:_R_B1 + 1, 0:HID]                    # (1, H)
    cols1 = [xn_ref[pl.ds(k, T1, stride=STRIDE), :] for k in range(KSZ)]
    im1 = jnp.concatenate(cols1, axis=1)                  # (T1, 8)
    h1 = jnp.maximum(
        jnp.dot(im1, w1, preferred_element_type=jnp.float32) + b1, 0.0)  # (T1, H)

    # --- conv2: Conv1d(H -> H, k=4, s=2, p=1) + ReLU ---------------------------
    # Zero-init the padded h1 scratch, store h1 at an 8-row aligned offset, then
    # build the (T2, 4H=128) im2col with 4 strided loads and do ONE MXU matmul.
    h1p_ref[...] = jnp.zeros((T1 + 2 * _H1_OFF, HID), jnp.float32)
    h1p_ref[_H1_OFF:_H1_OFF + T1, :] = h1
    w2 = p_ref[_R_W2:_R_W2 + KSZ * HID, 0:HID]            # (4H, H)
    b2 = p_ref[_R_B2:_R_B2 + 1, 0:HID]                    # (1, H)
    cols2 = [h1p_ref[pl.ds(_H1_OFF - 1 + k, T2, stride=STRIDE), :]
             for k in range(KSZ)]                         # 4 x (T2, H)
    im2 = jnp.concatenate(cols2, axis=1)                  # (T2, 4H=128)
    h2 = jnp.maximum(
        jnp.dot(im2, w2, preferred_element_type=jnp.float32) + b2, 0.0)  # (T2, H)

    # --- VQ bottleneck with the 1x1 projection folded in -----------------------
    # scores[t, c] = h2[t] @ (-2 w3 cb_c) + (||cb_c||^2 - 2 b3.cb_c); the
    # frame-constant ||z||^2 term never changes the argmin and is dropped.
    a = p_ref[_R_A:_R_A + HID, 0:CODES]                   # (H, C)
    d0 = p_ref[_R_D0:_R_D0 + 1, 0:CODES]                  # (1, C)
    scores = jnp.dot(h2, a, preferred_element_type=jnp.float32) + d0   # (T2, C)
    smin = jnp.min(scores, axis=-1, keepdims=True)
    ids = jax.lax.broadcasted_iota(jnp.int32, scores.shape, 1)
    big = jnp.int32(2 ** 30)
    codes = jnp.min(jnp.where(scores <= smin, ids, big),
                    axis=-1, keepdims=True)               # first argmin (torch tie-break)
    codes_ref[...] = codes.astype(jnp.int32)              # (T2, 1) lane-major store


# ------------------------------ parameters ------------------------------------

def init_params(key, in_ch=IN_CH, hidden=HID, latent=LAT, num_codes=CODES, k=KSZ):
    """Deterministic synthetic VQ-VAE quantizer parameters (no checkpoint load)."""
    ks = jax.random.split(key, 4)

    def w(kk, shape, fan_in):
        return jax.random.normal(kk, shape, jnp.float32) / jnp.sqrt(float(fan_in))

    return {
        # Conv1d(2 -> H, k=4, s=2, p=1) taps, rows k-major / channel-minor
        # (row = 2k + ch).  NOTE: a real PyTorch checkpoint has weight shape
        # (out, in, k) and needs the matching permutation before packing.
        "w1": w(ks[0], (k * in_ch, hidden), k * in_ch),
        "b1": jnp.zeros((hidden,), jnp.float32),
        # Conv1d(H -> H, k=4, s=2, p=1) taps, rows k-major / channel-minor.
        "w2": w(ks[1], (k * hidden, hidden), k * hidden),
        "b2": jnp.zeros((hidden,), jnp.float32),
        # 1x1 projection + codebook.
        "w3": w(ks[2], (hidden, latent), hidden),
        "b3": jnp.zeros((latent,), jnp.float32),
        "codebook": w(ks[3], (num_codes, latent), latent),
    }


def fold_params(params):
    """One-time prep: fold the 1x1 projection into the VQ distance and pack all
    parameters into a single f32 slab (one DMA instead of seven)."""
    cb = params["codebook"]                                 # (C, LAT)
    a = -2.0 * (params["w3"] @ cb.T)                        # (H, C)
    d0 = jnp.sum(cb * cb, axis=1) - 2.0 * (cb @ params["b3"])   # (C,)

    slab = jnp.zeros((_SLAB_ROWS, _SLAB_LANES), jnp.float32)
    slab = slab.at[_R_W1:_R_W1 + KSZ * IN_CH, :HID].set(params["w1"])
    slab = slab.at[_R_B1, :HID].set(params["b1"])
    slab = slab.at[_R_W2:_R_W2 + KSZ * HID, :HID].set(params["w2"])
    slab = slab.at[_R_B2, :HID].set(params["b2"])
    slab = slab.at[_R_A:_R_A + HID, :CODES].set(a)
    slab = slab.at[_R_D0, :CODES].set(d0)
    return slab


# ------------------------------ forward wrapper --------------------------------

@functools.partial(jax.jit, static_argnames=("dense",))
def f0_tokenizer_forward(f0, vuv, param_slab, dense=False):
    """Equivalent of F0Tokenizer.forward for the default path
    (dense=False, compute_vqvae_pred=False, speaker=None)."""
    if dense:
        return f0
    T = f0.shape[-1]
    assert T % 4 == 0, "demo wrapper assumes T divisible by 4"
    T1, T2 = T // 2, T // 4

    # x = stack([f0, vuv]) channel-last, plus the conv pad=1 zero frame per side
    # (padding is neutral for the in-kernel mean / normalization: f0=vuv=0).
    x = jnp.stack([jnp.asarray(f0, jnp.float32),
                   jnp.asarray(vuv, jnp.float32)], axis=-1)      # (T, 2)
    xpad = jnp.pad(x, ((PAD, PAD), (0, 0)))                      # (T+2, 2)

    vmem = pl.BlockSpec(memory_space=pltpu.MemorySpace.VMEM)
    codes = pl.pallas_call(
        _f0_vqvae_fused_kernel,
        out_shape=jax.ShapeDtypeStruct((T2, 1), jnp.int32),
        in_specs=[vmem, vmem],
        out_specs=vmem,
        scratch_shapes=[
            pltpu.VMEM((T + 2 * PAD, IN_CH), jnp.float32),       # normalized padded input
            pltpu.VMEM((T1 + 2 * _H1_OFF, HID), jnp.float32),    # zero-padded h1
        ],
    )(xpad, param_slab)
    return codes.reshape(-1)                                      # (T/4,) code ids


# ----------------------------------- main --------------------------------------

if __name__ == "__main__":
    key = jax.random.PRNGKey(0)
    k_f0, k_vuv, k_params = jax.random.split(key, 3)

    T = 128  # number of f0 frames (hop=80 @ 16kHz -> ~0.64 s of audio)
    vuv = (jax.random.uniform(k_vuv, (T,)) > 0.3).astype(jnp.float32)
    f0 = (100.0 + 80.0 * jax.random.uniform(k_f0, (T,))) * vuv    # 0 Hz on unvoiced frames

    params = init_params(k_params)
    slab = fold_params(params)

    codes = jax.block_until_ready(f0_tokenizer_forward(f0, vuv, slab))
    assert codes.shape == (T // 4,) and codes.dtype == jnp.int32, (codes.shape, codes.dtype)
    print("KERNEL_OK")
</pallas_src>

<mosaic_0001>
module attributes {stable_mosaic.version = 11 : i64} {
  func.func @_f0_vqvae_fused_kernel(%arg0: memref<130x2xf32, #tpu.memory_space<vmem>>, %arg1: memref<192x64xf32, #tpu.memory_space<vmem>>, %arg2: memref<32x1xi32, #tpu.memory_space<vmem>>, %arg3: memref<130x2xf32, #tpu.memory_space<vmem>>, %arg4: memref<80x32xf32, #tpu.memory_space<vmem>>) attributes {dimension_semantics = [], scalar_prefetch = 0 : i64, scratch_operands = 2 : i64, tpu.core_type = #tpu.core_type<tc>} {
    %c0 = arith.constant 0 : index
    %c0_0 = arith.constant 0 : index
    %0 = vector.load %arg0[%c0, %c0_0] : memref<130x2xf32, #tpu.memory_space<vmem>>, vector<130x2xf32>
    %1 = vector.extract_strided_slice %0 {offsets = [0, 0], sizes = [130, 1], strides = [1, 1]} : vector<130x2xf32> to vector<130x1xf32>
    %2 = vector.extract_strided_slice %0 {offsets = [0, 1], sizes = [130, 1], strides = [1, 1]} : vector<130x2xf32> to vector<130x1xf32>
    %cst = arith.constant 0.000000e+00 : f32
    %3 = vector.broadcast %cst : f32 to vector<130x1xf32>
    %4 = arith.cmpf one, %2, %3 : vector<130x1xf32>
    %5 = arith.extui %4 : vector<130x1xi1> to vector<130x1xi32>
    %6 = arith.sitofp %5 : vector<130x1xi32> to vector<130x1xf32>
    %7 = vector.shape_cast %6 : vector<130x1xf32> to vector<1x130x1xf32>
    %cst_1 = arith.constant dense<0.000000e+00> : vector<1xf32>
    %8 = vector.multi_reduction <add>, %7, %cst_1 [1, 2] : vector<1x130x1xf32> to vector<1xf32>
    %9 = vector.shape_cast %8 : vector<1xf32> to vector<1x1x1xf32>
    %10 = vector.extract %9[0, 0, 0] : f32 from vector<1x1x1xf32>
    %cst_2 = arith.constant 0.000000e+00 : f32
    %11 = vector.broadcast %cst_2 : f32 to vector<130x1xf32>
    %12 = arith.select %4, %1, %11 : vector<130x1xi1>, vector<130x1xf32>
    %13 = vector.shape_cast %12 : vector<130x1xf32> to vector<1x130x1xf32>
    %cst_3 = arith.constant dense<0.000000e+00> : vector<1xf32>
    %14 = vector.multi_reduction <add>, %13, %cst_3 [1, 2] : vector<1x130x1xf32> to vector<1xf32>
    %15 = vector.shape_cast %14 : vector<1xf32> to vector<1x1x1xf32>
    %16 = vector.extract %15[0, 0, 0] : f32 from vector<1x1x1xf32>
    %17 = arith.divf %16, %10 : f32
    %18 = tpu.iota {dimensions = array<i32: 1>} : vector<130x2xi32>
    %c0_i32 = arith.constant 0 : i32
    %19 = vector.broadcast %c0_i32 : i32 to vector<130x2xi32>
    %20 = arith.cmpi eq, %18, %19 : vector<130x2xi32>
    %cst_4 = arith.constant 0.000000e+00 : f32
    %21 = vector.broadcast %cst_4 : f32 to vector<130x2xf32>
    %22 = arith.cmpf one, %0, %21 : vector<130x2xf32>
    %23 = arith.andi %20, %22 : vector<130x2xi1>
    %24 = vector.broadcast %17 : f32 to vector<130x2xf32>
    %25 = arith.subf %0, %24 : vector<130x2xf32>
    %26 = arith.select %23, %25, %0 : vector<130x2xi1>, vector<130x2xf32>
    %c0_5 = arith.constant 0 : index
    %c0_6 = arith.constant 0 : index
    %27 = vector.load %arg3[%c0_5, %c0_6] : memref<130x2xf32, #tpu.memory_space<vmem>>, vector<130x2xf32>
    tpu.vector_store %arg3[%c0_5, %c0_6], %26 {strides = array<i32>} : memref<130x2xf32, #tpu.memory_space<vmem>>, vector<130x2xf32>,
    %c0_7 = arith.constant 0 : index
    %c0_8 = arith.constant 0 : index
    %28 = vector.load %arg1[%c0_7, %c0_8] : memref<192x64xf32, #tpu.memory_space<vmem>>, vector<8x32xf32>
    %c8 = arith.constant 8 : index
    %c0_9 = arith.constant 0 : index
    %29 = vector.load %arg1[%c8, %c0_9] : memref<192x64xf32, #tpu.memory_space<vmem>>, vector<1x32xf32>
    %c0_10 = arith.constant 0 : index
    %c0_11 = arith.constant 0 : index
    %30 = tpu.strided_load %arg3[%c0_10, %c0_11] {strides = array<i32: 2, 1>} : memref<130x2xf32, #tpu.memory_space<vmem>>, vector<64x2xf32>
    %c1 = arith.constant 1 : index
    %c0_12 = arith.constant 0 : index
    %31 = tpu.strided_load %arg3[%c1, %c0_12] {strides = array<i32: 2, 1>} : memref<130x2xf32, #tpu.memory_space<vmem>>, vector<64x2xf32>
    %c2 = arith.constant 2 : index
    %c0_13 = arith.constant 0 : index
    %32 = tpu.strided_load %arg3[%c2, %c0_13] {strides = array<i32: 2, 1>} : memref<130x2xf32, #tpu.memory_space<vmem>>, vector<64x2xf32>
    %c3 = arith.constant 3 : index
    %c0_14 = arith.constant 0 : index
    %33 = tpu.strided_load %arg3[%c3, %c0_14] {strides = array<i32: 2, 1>} : memref<130x2xf32, #tpu.memory_space<vmem>>, vector<64x2xf32>
    %34 = tpu.concatenate %30, %31, %32, %33 in 1 : vector<64x2xf32>, vector<64x2xf32>, vector<64x2xf32>, vector<64x2xf32> -> vector<64x8xf32>
    %cst_15 = arith.constant dense<0.000000e+00> : vector<64x32xf32>
    %35 = tpu.matmul %34, %28, %cst_15 {dimension_numbers = #tpu.dot_dimension_numbers<[1], [0], [0], [1], [0, 0, 1, 1], [], []>} : vector<64x8xf32>, vector<8x32xf32>, vector<64x32xf32> -> vector<64x32xf32>
    %36 = vector.broadcast %29 : vector<1x32xf32> to vector<64x32xf32>
    %37 = arith.addf %35, %36 : vector<64x32xf32>
    %cst_16 = arith.constant 0.000000e+00 : f32
    %38 = vector.broadcast %cst_16 : f32 to vector<64x32xf32>
    %39 = arith.maximumf %37, %38 : vector<64x32xf32>
    %cst_17 = arith.constant 0.000000e+00 : f32
    %40 = vector.broadcast %cst_17 : f32 to vector<80x32xf32>
    %c0_18 = arith.constant 0 : index
    %c0_19 = arith.constant 0 : index
    %41 = vector.load %arg4[%c0_18, %c0_19] : memref<80x32xf32, #tpu.memory_space<vmem>>, vector<80x32xf32>
    tpu.vector_store %arg4[%c0_18, %c0_19], %40 {strides = array<i32>} : memref<80x32xf32, #tpu.memory_space<vmem>>, vector<80x32xf32>,
    %c8_20 = arith.constant 8 : index
    %c0_21 = arith.constant 0 : index
    %42 = vector.load %arg4[%c8_20, %c0_21] : memref<80x32xf32, #tpu.memory_space<vmem>>, vector<64x32xf32>
    tpu.vector_store %arg4[%c8_20, %c0_21], %39 {strides = array<i32>} : memref<80x32xf32, #tpu.memory_space<vmem>>, vector<64x32xf32>,
    %c16 = arith.constant 16 : index
    %c0_22 = arith.constant 0 : index
    %43 = vector.load %arg1[%c16, %c0_22] : memref<192x64xf32, #tpu.memory_space<vmem>>, vector<128x32xf32>
    %c144 = arith.constant 144 : index
    %c0_23 = arith.constant 0 : index
    %44 = vector.load %arg1[%c144, %c0_23] : memref<192x64xf32, #tpu.memory_space<vmem>>, vector<1x32xf32>
    %c7 = arith.constant 7 : index
    %c0_24 = arith.constant 0 : index
    %45 = tpu.strided_load %arg4[%c7, %c0_24] {strides = array<i32: 2, 1>} : memref<80x32xf32, #tpu.memory_space<vmem>>, vector<32x32xf32>
    %c8_25 = arith.constant 8 : index
    %c0_26 = arith.constant 0 : index
    %46 = tpu.strided_load %arg4[%c8_25, %c0_26] {strides = array<i32: 2, 1>} : memref<80x32xf32, #tpu.memory_space<vmem>>, vector<32x32xf32>
    %c9 = arith.constant 9 : index
    %c0_27 = arith.constant 0 : index
    %47 = tpu.strided_load %arg4[%c9, %c0_27] {strides = array<i32: 2, 1>} : memref<80x32xf32, #tpu.memory_space<vmem>>, vector<32x32xf32>
    %c10 = arith.constant 10 : index
    %c0_28 = arith.constant 0 : index
    %48 = tpu.strided_load %arg4[%c10, %c0_28] {strides = array<i32: 2, 1>} : memref<80x32xf32, #tpu.memory_space<vmem>>, vector<32x32xf32>
    %49 = tpu.concatenate %45, %46, %47, %48 in 1 : vector<32x32xf32>, vector<32x32xf32>, vector<32x32xf32>, vector<32x32xf32> -> vector<32x128xf32>
    %cst_29 = arith.constant dense<0.000000e+00> : vector<32x32xf32>
    %50 = tpu.matmul %49, %43, %cst_29 {dimension_numbers = #tpu.dot_dimension_numbers<[1], [0], [0], [1], [0, 0, 1, 1], [], []>} : vector<32x128xf32>, vector<128x32xf32>, vector<32x32xf32> -> vector<32x32xf32>
    %51 = vector.broadcast %44 : vector<1x32xf32> to vector<32x32xf32>
    %52 = arith.addf %50, %51 : vector<32x32xf32>
    %cst_30 = arith.constant 0.000000e+00 : f32
    %53 = vector.broadcast %cst_30 : f32 to vector<32x32xf32>
    %54 = arith.maximumf %52, %53 : vector<32x32xf32>
    %c152 = arith.constant 152 : index
    %c0_31 = arith.constant 0 : index
    %55 = vector.load %arg1[%c152, %c0_31] : memref<192x64xf32, #tpu.memory_space<vmem>>, vector<32x64xf32>
    %c184 = arith.constant 184 : index
    %c0_32 = arith.constant 0 : index
    %56 = vector.load %arg1[%c184, %c0_32] : memref<192x64xf32, #tpu.memory_space<vmem>>, vector<1x64xf32>
    %cst_33 = arith.constant dense<0.000000e+00> : vector<32x64xf32>
    %57 = tpu.matmul %54, %55, %cst_33 {dimension_numbers = #tpu.dot_dimension_numbers<[1], [0], [0], [1], [0, 0, 1, 1], [], []>} : vector<32x32xf32>, vector<32x64xf32>, vector<32x64xf32> -> vector<32x64xf32>
    %58 = vector.broadcast %56 : vector<1x64xf32> to vector<32x64xf32>
    %59 = arith.addf %57, %58 : vector<32x64xf32>
    %cst_34 = arith.constant dense<0x7F800000> : vector<32xf32>
    %60 = vector.multi_reduction <minimumf>, %59, %cst_34 [1] : vector<32x64xf32> to vector<32xf32>
    %61 = vector.shape_cast %60 : vector<32xf32> to vector<32x1xf32>
    %62 = tpu.iota {dimensions = array<i32: 1>} : vector<32x64xi32>
    %63 = vector.broadcast %61 : vector<32x1xf32> to vector<32x64xf32>
    %64 = arith.cmpf ole, %59, %63 : vector<32x64xf32>
    %c1073741824_i32 = arith.constant 1073741824 : i32
    %65 = vector.broadcast %c1073741824_i32 : i32 to vector<32x64xi32>
    %66 = arith.select %64, %62, %65 : vector<32x64xi1>, vector<32x64xi32>
    %cst_35 = arith.constant dense<2147483647> : vector<32xi32>
    %67 = vector.multi_reduction <minsi>, %66, %cst_35 [1] : vector<32x64xi32> to vector<32xi32>
    %68 = vector.shape_cast %67 : vector<32xi32> to vector<32x1xi32>
    %c0_36 = arith.constant 0 : index
    %c0_37 = arith.constant 0 : index
    %69 = vector.load %arg2[%c0_36, %c0_37] : memref<32x1xi32, #tpu.memory_space<vmem>>, vector<32x1xi32>
    tpu.vector_store %arg2[%c0_36, %c0_37], %68 {strides = array<i32>} : memref<32x1xi32, #tpu.memory_space<vmem>>, vector<32x1xi32>,
    return
  }
}

</mosaic_0001>

<llo_original>
// kernel: f0_tokenizer_forward.1
$region0: #{f0_tokenizer_forward.1}
  #allocation0 [shape = 'u32[]', space=smem, size = 0x4, offset = 0x4, fixed_abs, tag = 'smem constant byte address 0x4 - core index']
  #allocation1 [shape = 'u32[144,128]{1,0:T(1,128)}', space=vmem, size = 0x12000, scoped, tag = 'internal scratch']
  #allocation2 [shape = 'f32[130,2]{1,0:T(8,128)}', space=vmem, size = 0x11000, scoped, tag = 'scratch operand']
  #allocation3 [shape = 'f32[80,32]{1,0:T(8,128)}', space=vmem, size = 0xa000, scoped, tag = 'scratch operand']
  %s0 = inlined_call_operand.vmem [shape: f32[130,2], index: 0, kind: input, shape index: {}]
  %s1 = inlined_call_operand.vmem [shape: f32[192,64], index: 1, kind: input, shape index: {}]
  %s2 = inlined_call_operand.vmem [shape: s32[32,1], index: 2, kind: output, shape index: {}]
  %s3 = sld [smem:[#allocation0]]
  $region18: #{f0_tokenizer_forward.1} parent=0
    _
  %s5 = ssub.s32 1, %s3
  %s6 = scalar_select 0, %s5, %s3
  // Predicated region
  $region2: #{f0_tokenizer_forward.1} parent=0 // pred_check
    _
  $region3: #{f0_tokenizer_forward.1} parent=0 // pred_check_branch
    %8 = sbr.rel (0) target = $region5
  $region4: #{f0_tokenizer_forward.1} parent=0 // pred_region
    _
  $region5: #{f0_tokenizer_forward.1} parent=0 // pred_fallthru
    _
  // Predicated region
  $region6: #{f0_tokenizer_forward.1} parent=0 // pred_check
    _
  $region7: #{f0_tokenizer_forward.1} parent=0 // pred_check_branch
    %10 = sbr.rel (0) target = $region9
  $region8: #{f0_tokenizer_forward.1} parent=0 // pred_region
    _
  $region9: #{f0_tokenizer_forward.1} parent=0 // pred_fallthru
    _
  %v11 = vld [vmem:[%s0] sm:$0xff]
  %v12 = vld [vmem:[%s0 + $0x8] sm:$0xff]
  %v13 = vld [vmem:[%s0 + $0x10] sm:$0xff]
  %v14 = vld [vmem:[%s0 + $0x18] sm:$0xff]
  %v15 = vld [vmem:[%s0 + $0x20] sm:$0xff]
  %v16 = vld [vmem:[%s0 + $0x28] sm:$0xff]
  %v17 = vld [vmem:[%s0 + $0x30] sm:$0xff]
  %v18 = vld [vmem:[%s0 + $0x38] sm:$0xff]
  %v19 = vld [vmem:[%s0 + $0x40] sm:$0xff]
  %v20 = vld [vmem:[%s0 + $0x48] sm:$0xff]
  %v21 = vld [vmem:[%s0 + $0x50] sm:$0xff]
  %v22 = vld [vmem:[%s0 + $0x58] sm:$0xff]
  %v23 = vld [vmem:[%s0 + $0x60] sm:$0xff]
  %v24 = vld [vmem:[%s0 + $0x68] sm:$0xff]
  %v25 = vld [vmem:[%s0 + $0x70] sm:$0xff]
  %v26 = vld [vmem:[%s0 + $0x78] sm:$0xff]
  %v27 = vld [vmem:[%s0 + $0x80] sm:$0x3]
  %vm28 = vcmp.ne.f32.partialorder %v11, 0.0
  %vm29 = vcmp.ne.f32.partialorder %v12, 0.0
  %vm30 = vcmp.ne.f32.partialorder %v13, 0.0
  %vm31 = vcmp.ne.f32.partialorder %v14, 0.0
  %vm32 = vcmp.ne.f32.partialorder %v15, 0.0
  %vm33 = vcmp.ne.f32.partialorder %v16, 0.0
  %vm34 = vcmp.ne.f32.partialorder %v17, 0.0
  %vm35 = vcmp.ne.f32.partialorder %v18, 0.0
  %vm36 = vcmp.ne.f32.partialorder %v19, 0.0
  %vm37 = vcmp.ne.f32.partialorder %v20, 0.0
  %vm38 = vcmp.ne.f32.partialorder %v21, 0.0
  %vm39 = vcmp.ne.f32.partialorder %v22, 0.0
  %vm40 = vcmp.ne.f32.partialorder %v23, 0.0
  %vm41 = vcmp.ne.f32.partialorder %v24, 0.0
  %vm42 = vcmp.ne.f32.partialorder %v25, 0.0
  %vm43 = vcmp.ne.f32.partialorder %v26, 0.0
  %vm44 = vcmp.ne.f32.partialorder %v27, 0.0
  %v45 = vsel %vm28, 1, 0
  %v46 = vsel %vm29, 1, 0
  %v47 = vsel %vm30, 1, 0
  %v48 = vsel %vm31, 1, 0
  %v49 = vsel %vm32, 1, 0
  %v50 = vsel %vm33, 1, 0
  %v51 = vsel %vm34, 1, 0
  %v52 = vsel %vm35, 1, 0
  %v53 = vsel %vm36, 1, 0
  %v54 = vsel %vm37, 1, 0
  %v55 = vsel %vm38, 1, 0
  %v56 = vsel %vm39, 1, 0
  %v57 = vsel %vm40, 1, 0
  %v58 = vsel %vm41, 1, 0
  %v59 = vsel %vm42, 1, 0
  %v60 = vsel %vm43, 1, 0
  %v61 = vsel %vm44, 1, 0
  %v62 = vcvt.s32.f32 %v45
  %v63 = vcvt.s32.f32 %v46
  %v64 = vcvt.s32.f32 %v47
  %v65 = vcvt.s32.f32 %v48
  %v66 = vcvt.s32.f32 %v49
  %v67 = vcvt.s32.f32 %v50
  %v68 = vcvt.s32.f32 %v51
  %v69 = vcvt.s32.f32 %v52
  %v70 = vcvt.s32.f32 %v53
  %v71 = vcvt.s32.f32 %v54
  %v72 = vcvt.s32.f32 %v55
  %v73 = vcvt.s32.f32 %v56
  %v74 = vcvt.s32.f32 %v57
  %v75 = vcvt.s32.f32 %v58
  %v76 = vcvt.s32.f32 %v59
  %v77 = vcvt.s32.f32 %v60
  %v78 = vcvt.s32.f32 %v61
  %96 = vrot.lane.b32.xlu0 %v62, 127
  %v97 = vpop.permute.xlu0 %96
  %98 = vrot.lane.b32.xlu0 %v63, 127
  %v99 = vpop.permute.xlu0 %98
  %100 = vrot.lane.b32.xlu0 %v64, 127
  %v101 = vpop.permute.xlu0 %100
  %102 = vrot.lane.b32.xlu0 %v65, 127
  %v103 = vpop.permute.xlu0 %102
  %104 = vrot.lane.b32.xlu0 %v66, 127
  %v105 = vpop.permute.xlu0 %104
  %106 = vrot.lane.b32.xlu0 %v67, 127
  %v107 = vpop.permute.xlu0 %106
  %108 = vrot.lane.b32.xlu0 %v68, 127
  %v109 = vpop.permute.xlu0 %108
  %110 = vrot.lane.b32.xlu0 %v69, 127
  %v111 = vpop.permute.xlu0 %110
  %112 = vrot.lane.b32.xlu0 %v70, 127
  %v113 = vpop.permute.xlu0 %112
  %114 = vrot.lane.b32.xlu0 %v71, 127
  %v115 = vpop.permute.xlu0 %114
  %116 = vrot.lane.b32.xlu0 %v72, 127
  %v117 = vpop.permute.xlu0 %116
  %118 = vrot.lane.b32.xlu0 %v73, 127
  %v119 = vpop.permute.xlu0 %118
  %120 = vrot.lane.b32.xlu0 %v74, 127
  %v121 = vpop.permute.xlu0 %120
  %122 = vrot.lane.b32.xlu0 %v75, 127
  %v123 = vpop.permute.xlu0 %122
  %124 = vrot.lane.b32.xlu0 %v76, 127
  %v125 = vpop.permute.xlu0 %124
  %126 = vrot.lane.b32.xlu0 %v77, 127
  %v127 = vpop.permute.xlu0 %126
  %128 = vrot.lane.b32.xlu0 %v78, 127
  %v129 = vpop.permute.xlu0 %128
  %vm147 = vcmask 7168
  %v148 = vsel %vm147, %v97, 0.0
  %v149 = vsel %vm147, %v99, 0.0
  %v150 = vadd.f32 %v148, %v149
  %v151 = vsel %vm147, %v101, 0.0
  %v152 = vadd.f32 %v150, %v151
  %v153 = vsel %vm147, %v103, 0.0
  %v154 = vadd.f32 %v152, %v153
  %v155 = vsel %vm147, %v105, 0.0
  %v156 = vadd.f32 %v154, %v155
  %v157 = vsel %vm147, %v107, 0.0
  %v158 = vadd.f32 %v156, %v157
  %v159 = vsel %vm147, %v109, 0.0
  %v160 = vadd.f32 %v158, %v159
  %v161 = vsel %vm147, %v111, 0.0
  %v162 = vadd.f32 %v160, %v161
  %v163 = vsel %vm147, %v113, 0.0
  %v164 = vadd.f32 %v162, %v163
  %v165 = vsel %vm147, %v115, 0.0
  %v166 = vadd.f32 %v164, %v165
  %v167 = vsel %vm147, %v117, 0.0
  %v168 = vadd.f32 %v166, %v167
  %v169 = vsel %vm147, %v119, 0.0
  %v170 = vadd.f32 %v168, %v169
  %v171 = vsel %vm147, %v121, 0.0
  %v172 = vadd.f32 %v170, %v171
  %v173 = vsel %vm147, %v123, 0.0
  %v174 = vadd.f32 %v172, %v173
  %v175 = vsel %vm147, %v125, 0.0
  %v176 = vadd.f32 %v174, %v175
  %v177 = vsel %vm147, %v127, 0.0
  %v178 = vadd.f32 %v176, %v177
  %vm179 = vcmask 1024
  %v180 = vsel %vm179, %v129, 0.0
  %v181 = vadd.f32 %v178, %v180
  %182 = vadd.xlane.f32.xlu0 %v181
  %v183 = vpop.xlane.xlu0 %182
  %v184 = vrot.slane %v183, 4
  %v185 = vadd.f32 %v183, %v184
  %v186 = vrot.slane %v185, 2
  %v187 = vadd.f32 %v185, %v186
  %v188 = vrot.slane %v187, 1
  %v189 = vadd.f32 %v187, %v188
  %s190 = vtos %v189
  %208 = vrot.lane.b32.xlu0 %v11, 1
  %v209 = vpop.permute.xlu0 %208
  %210 = vrot.lane.b32.xlu0 %v12, 1
  %v211 = vpop.permute.xlu0 %210
  %212 = vrot.lane.b32.xlu0 %v13, 1
  %v213 = vpop.permute.xlu0 %212
  %214 = vrot.lane.b32.xlu0 %v14, 1
  %v215 = vpop.permute.xlu0 %214
  %216 = vrot.lane.b32.xlu0 %v15, 1
  %v217 = vpop.permute.xlu0 %216
  %218 = vrot.lane.b32.xlu0 %v16, 1
  %v219 = vpop.permute.xlu0 %218
  %220 = vrot.lane.b32.xlu0 %v17, 1
  %v221 = vpop.permute.xlu0 %220
  %222 = vrot.lane.b32.xlu0 %v18, 1
  %v223 = vpop.permute.xlu0 %222
  %224 = vrot.lane.b32.xlu0 %v19, 1
  %v225 = vpop.permute.xlu0 %224
  %226 = vrot.lane.b32.xlu0 %v20, 1
  %v227 = vpop.permute.xlu0 %226
  %228 = vrot.lane.b32.xlu0 %v21, 1
  %v229 = vpop.permute.xlu0 %228
  %230 = vrot.lane.b32.xlu0 %v22, 1
  %v231 = vpop.permute.xlu0 %230
  %232 = vrot.lane.b32.xlu0 %v23, 1
  %v233 = vpop.permute.xlu0 %232
  %234 = vrot.lane.b32.xlu0 %v24, 1
  %v235 = vpop.permute.xlu0 %234
  %236 = vrot.lane.b32.xlu0 %v25, 1
  %v237 = vpop.permute.xlu0 %236
  %238 = vrot.lane.b32.xlu0 %v26, 1
  %v239 = vpop.permute.xlu0 %238
  %240 = vrot.lane.b32.xlu0 %v27, 1
  %v241 = vpop.permute.xlu0 %240
  %v259 = vsel %vm28, %v209, 0.0
  %v260 = vsel %vm29, %v211, 0.0
  %v261 = vsel %vm30, %v213, 0.0
  %v262 = vsel %vm31, %v215, 0.0
  %v263 = vsel %vm32, %v217, 0.0
  %v264 = vsel %vm33, %v219, 0.0
  %v265 = vsel %vm34, %v221, 0.0
  %v266 = vsel %vm35, %v223, 0.0
  %v267 = vsel %vm36, %v225, 0.0
  %v268 = vsel %vm37, %v227, 0.0
  %v269 = vsel %vm38, %v229, 0.0
  %v270 = vsel %vm39, %v231, 0.0
  %v271 = vsel %vm40, %v233, 0.0
  %v272 = vsel %vm41, %v235, 0.0
  %v273 = vsel %vm42, %v237, 0.0
  %v274 = vsel %vm43, %v239, 0.0
  %v275 = vsel %vm44, %v241, 0.0
  %293 = vrot.lane.b32.xlu0 %v259, 127
  %v294 = vpop.permute.xlu0 %293
  %295 = vrot.lane.b32.xlu0 %v260, 127
  %v296 = vpop.permute.xlu0 %295
  %297 = vrot.lane.b32.xlu0 %v261, 127
  %v298 = vpop.permute.xlu0 %297
  %299 = vrot.lane.b32.xlu0 %v262, 127
  %v300 = vpop.permute.xlu0 %299
  %301 = vrot.lane.b32.xlu0 %v263, 127
  %v302 = vpop.permute.xlu0 %301
  %303 = vrot.lane.b32.xlu0 %v264, 127
  %v304 = vpop.permute.xlu0 %303
  %305 = vrot.lane.b32.xlu0 %v265, 127
  %v306 = vpop.permute.xlu0 %305
  %307 = vrot.lane.b32.xlu0 %v266, 127
  %v308 = vpop.permute.xlu0 %307
  %309 = vrot.lane.b32.xlu0 %v267, 127
  %v310 = vpop.permute.xlu0 %309
  %311 = vrot.lane.b32.xlu0 %v268, 127
  %v312 = vpop.permute.xlu0 %311
  %313 = vrot.lane.b32.xlu0 %v269, 127
  %v314 = vpop.permute.xlu0 %313
  %315 = vrot.lane.b32.xlu0 %v270, 127
  %v316 = vpop.permute.xlu0 %315
  %317 = vrot.lane.b32.xlu0 %v271, 127
  %v318 = vpop.permute.xlu0 %317
  %319 = vrot.lane.b32.xlu0 %v272, 127
  %v320 = vpop.permute.xlu0 %319
  %321 = vrot.lane.b32.xlu0 %v273, 127
  %v322 = vpop.permute.xlu0 %321
  %323 = vrot.lane.b32.xlu0 %v274, 127
  %v324 = vpop.permute.xlu0 %323
  %325 = vrot.lane.b32.xlu0 %v275, 127
  %v326 = vpop.permute.xlu0 %325
  %v344 = vsel %vm147, %v294, 0.0
  %v345 = vsel %vm147, %v296, 0.0
  %v346 = vadd.f32 %v344, %v345
  %v347 = vsel %vm147, %v298, 0.0
  %v348 = vadd.f32 %v346, %v347
  %v349 = vsel %vm147, %v300, 0.0
  %v350 = vadd.f32 %v348, %v349
  %v351 = vsel %vm147, %v302, 0.0
  %v352 = vadd.f32 %v350, %v351
  %v353 = vsel %vm147, %v304, 0.0
  %v354 = vadd.f32 %v352, %v353
  %v355 = vsel %vm147, %v306, 0.0
  %v356 = vadd.f32 %v354, %v355
  %v357 = vsel %vm147, %v308, 0.0
  %v358 = vadd.f32 %v356, %v357
  %v359 = vsel %vm147, %v310, 0.0
  %v360 = vadd.f32 %v358, %v359
  %v361 = vsel %vm147, %v312, 0.0
  %v362 = vadd.f32 %v360, %v361
  %v363 = vsel %vm147, %v314, 0.0
  %v364 = vadd.f32 %v362, %v363
  %v365 = vsel %vm147, %v316, 0.0
  %v366 = vadd.f32 %v364, %v365
  %v367 = vsel %vm147, %v318, 0.0
  %v368 = vadd.f32 %v366, %v367
  %v369 = vsel %vm147, %v320, 0.0
  %v370 = vadd.f32 %v368, %v369
  %v371 = vsel %vm147, %v322, 0.0
  %v372 = vadd.f32 %v370, %v371
  %v373 = vsel %vm147, %v324, 0.0
  %v374 = vadd.f32 %v372, %v373
  %v375 = vsel %vm179, %v326, 0.0
  %v376 = vadd.f32 %v374, %v375
  %377 = vadd.xlane.f32.xlu0 %v376
  %v378 = vpop.xlane.xlu0 %377
  %v379 = vrot.slane %v378, 4
  %v380 = vadd.f32 %v378, %v379
  %v381 = vrot.slane %v380, 2
  %v382 = vadd.f32 %v380, %v381
  %v383 = vrot.slane %v382, 1
  %v384 = vadd.f32 %v382, %v383
  %s385 = vtos %v384
  %v386 = vstv %s190
  %v387 = vrcp.pop %v386
  %s388 = vtos %v387
  %s389 = smul.f32 %s385, %s388
  %v390 = vlaneseq
  %v391 = vand.u32 %v390, 127
  %vm392 = vcmp.eq.s32.totalorder %v391, 0
  %vm393 = vmand %vm392, %vm28
  %vm394 = vmand %vm392, %vm29
  %vm395 = vmand %vm392, %vm30
  %vm396 = vmand %vm392, %vm31
  %vm397 = vmand %vm392, %vm32
  %vm398 = vmand %vm392, %vm33
  %vm399 = vmand %vm392, %vm34
  %vm400 = vmand %vm392, %vm35
  %vm401 = vmand %vm392, %vm36
  %vm402 = vmand %vm392, %vm37
  %vm403 = vmand %vm392, %vm38
  %vm404 = vmand %vm392, %vm39
  %vm405 = vmand %vm392, %vm40
  %vm406 = vmand %vm392, %vm41
  %vm407 = vmand %vm392, %vm42
  %vm408 = vmand %vm392, %vm43
  %vm409 = vmand %vm392, %vm44
  %v410 = vstv %s389
  %v411 = vsub.f32 %v11, %v410
  %v412 = vsub.f32 %v12, %v410
  %v413 = vsub.f32 %v13, %v410
  %v414 = vsub.f32 %v14, %v410
  %v415 = vsub.f32 %v15, %v410
  %v416 = vsub.f32 %v16, %v410
  %v417 = vsub.f32 %v17, %v410
  %v418 = vsub.f32 %v18, %v410
  %v419 = vsub.f32 %v19, %v410
  %v420 = vsub.f32 %v20, %v410
  %v421 = vsub.f32 %v21, %v410
  %v422 = vsub.f32 %v22, %v410
  %v423 = vsub.f32 %v23, %v410
  %v424 = vsub.f32 %v24, %v410
  %v425 = vsub.f32 %v25, %v410
  %v426 = vsub.f32 %v26, %v410
  %v427 = vsub.f32 %v27, %v410
  %v428 = vsel %vm393, %v411, %v11
  %v429 = vsel %vm394, %v412, %v12
  %v430 = vsel %vm395, %v413, %v13
  %v431 = vsel %vm396, %v414, %v14
  %v432 = vsel %vm397, %v415, %v15
  %v433 = vsel %vm398, %v416, %v16
  %v434 = vsel %vm399, %v417, %v17
  %v435 = vsel %vm400, %v418, %v18
  %v436 = vsel %vm401, %v419, %v19
  %v437 = vsel %vm402, %v420, %v20
  %v438 = vsel %vm403, %v421, %v21
  %v439 = vsel %vm404, %v422, %v22
  %v440 = vsel %vm405, %v423, %v23
  %v441 = vsel %vm406, %v424, %v24
  %v442 = vsel %vm407, %v425, %v25
  %v443 = vsel %vm408, %v426, %v26
  %v444 = vsel %vm409, %v427, %v27
  %vm445 = vcmask 15360
  %446 = vst.msk [vmem:[#allocation2] sm:$0xff] %vm445, %v428
  %447 = vst.msk [vmem:[#allocation2 + $0x8] sm:$0xff] %vm445, %v429
  %448 = vst.msk [vmem:[#allocation2 + $0x10] sm:$0xff] %vm445, %v430
  %449 = vst.msk [vmem:[#allocation2 + $0x18] sm:$0xff] %vm445, %v431
  %450 = vst.msk [vmem:[#allocation2 + $0x20] sm:$0xff] %vm445, %v432
  %451 = vst.msk [vmem:[#allocation2 + $0x28] sm:$0xff] %vm445, %v433
  %452 = vst.msk [vmem:[#allocation2 + $0x30] sm:$0xff] %vm445, %v434
  %453 = vst.msk [vmem:[#allocation2 + $0x38] sm:$0xff] %vm445, %v435
  %454 = vst.msk [vmem:[#allocation2 + $0x40] sm:$0xff] %vm445, %v436
  %455 = vst.msk [vmem:[#allocation2 + $0x48] sm:$0xff] %vm445, %v437
  %456 = vst.msk [vmem:[#allocation2 + $0x50] sm:$0xff] %vm445, %v438
  %457 = vst.msk [vmem:[#allocation2 + $0x58] sm:$0xff] %vm445, %v439
  %458 = vst.msk [vmem:[#allocation2 + $0x60] sm:$0xff] %vm445, %v440
  %459 = vst.msk [vmem:[#allocation2 + $0x68] sm:$0xff] %vm445, %v441
  %460 = vst.msk [vmem:[#allocation2 + $0x70] sm:$0xff] %vm445, %v442
  %461 = vst.msk [vmem:[#allocation2 + $0x78] sm:$0xff] %vm445, %v443
  %vm462 = vcmask 9216
  %463 = vst.msk [vmem:[#allocation2 + $0x80] sm:$0x3] %vm462, %v444
  %v464 = vld [vmem:[%s1] sm:$0xff]
  %v465 = vld [vmem:[%s1 + $0x8] sm:$0x1]
  %v466 = vld [vmem:[#allocation2] ss:$2 sm:$0xff]
  %s467 = scalar_lea.vmem [#allocation2], 16
  %v468 = vld [vmem:[%s467] ss:$2 sm:$0xff]
  %s469 = scalar_lea.vmem [#allocation2], 32
  %v470 = vld [vmem:[%s469] ss:$2 sm:$0xff]
  %s471 = scalar_lea.vmem [#allocation2], 48
  %v472 = vld [vmem:[%s471] ss:$2 sm:$0xff]
  %s473 = scalar_lea.vmem [#allocation2], 64
  %v474 = vld [vmem:[%s473] ss:$2 sm:$0xff]
  %s475 = scalar_lea.vmem [#allocation2], 80
  %v476 = vld [vmem:[%s475] ss:$2 sm:$0xff]
  %s477 = scalar_lea.vmem [#allocation2], 96
  %v478 = vld [vmem:[%s477] ss:$2 sm:$0xff]
  %s479 = scalar_lea.vmem [#allocation2], 112
  %v480 = vld [vmem:[%s479] ss:$2 sm:$0xff]
  %s481 = scalar_lea.vmem [#allocation2], 1
  %v482 = vld [vmem:[%s481] ss:$2 sm:$0xff]
  %s483 = scalar_lea.vmem [#allocation2], 17
  %v484 = vld [vmem:[%s483] ss:$2 sm:$0xff]
  %s485 = scalar_lea.vmem [#allocation2], 33
  %v486 = vld [vmem:[%s485] ss:$2 sm:$0xff]
  %s487 = scalar_lea.vmem [#allocation2], 49
  %v488 = vld [vmem:[%s487] ss:$2 sm:$0xff]
  %s489 = scalar_lea.vmem [#allocation2], 65
  %v490 = vld [vmem:[%s489] ss:$2 sm:$0xff]
  %s491 = scalar_lea.vmem [#allocation2], 81
  %v492 = vld [vmem:[%s491] ss:$2 sm:$0xff]
  %s493 = scalar_lea.vmem [#allocation2], 97
  %v494 = vld [vmem:[%s493] ss:$2 sm:$0xff]
  %s495 = scalar_lea.vmem [#allocation2], 113
  %v496 = vld [vmem:[%s495] ss:$2 sm:$0xff]
  %s497 = scalar_lea.vmem [#allocation2], 2
  %v498 = vld [vmem:[%s497] ss:$2 sm:$0xff]
  %s499 = scalar_lea.vmem [#allocation2], 18
  %v500 = vld [vmem:[%s499] ss:$2 sm:$0xff]
  %s501 = scalar_lea.vmem [#allocation2], 34
  %v502 = vld [vmem:[%s501] ss:$2 sm:$0xff]
  %s503 = scalar_lea.vmem [#allocation2], 50
  %v504 = vld [vmem:[%s503] ss:$2 sm:$0xff]
  %s505 = scalar_lea.vmem [#allocation2], 66
  %v506 = vld [vmem:[%s505] ss:$2 sm:$0xff]
  %s507 = scalar_lea.vmem [#allocation2], 82
  %v508 = vld [vmem:[%s507] ss:$2 sm:$0xff]
  %s509 = scalar_lea.vmem [#allocation2], 98
  %v510 = vld [vmem:[%s509] ss:$2 sm:$0xff]
  %s511 = scalar_lea.vmem [#allocation2], 114
  %v512 = vld [vmem:[%s511] ss:$2 sm:$0xff]
  %s513 = scalar_lea.vmem [#allocation2], 3
  %v514 = vld [vmem:[%s513] ss:$2 sm:$0xff]
  %s515 = scalar_lea.vmem [#allocation2], 19
  %v516 = vld [vmem:[%s515] ss:$2 sm:$0xff]
  %s517 = scalar_lea.vmem [#allocation2], 35
  %v518 = vld [vmem:[%s517] ss:$2 sm:$0xff]
  %s519 = scalar_lea.vmem [#allocation2], 51
  %v520 = vld [vmem:[%s519] ss:$2 sm:$0xff]
  %s521 = scalar_lea.vmem [#allocation2], 67
  %v522 = vld [vmem:[%s521] ss:$2 sm:$0xff]
  %s523 = scalar_lea.vmem [#allocation2], 83
  %v524 = vld [vmem:[%s523] ss:$2 sm:$0xff]
  %s525 = scalar_lea.vmem [#allocation2], 99
  %v526 = vld [vmem:[%s525] ss:$2 sm:$0xff]
  %s527 = scalar_lea.vmem [#allocation2], 115
  %v528 = vld [vmem:[%s527] ss:$2 sm:$0xff]
  %537 = vrot.lane.b32.xlu0 %v482, 2
  %v538 = vpop.permute.xlu0 %537
  %539 = vrot.lane.b32.xlu0 %v484, 2
  %v540 = vpop.permute.xlu0 %539
  %541 = vrot.lane.b32.xlu0 %v486, 2
  %v542 = vpop.permute.xlu0 %541
  %543 = vrot.lane.b32.xlu0 %v488, 2
  %v544 = vpop.permute.xlu0 %543
  %545 = vrot.lane.b32.xlu0 %v490, 2
  %v546 = vpop.permute.xlu0 %545
  %547 = vrot.lane.b32.xlu0 %v492, 2
  %v548 = vpop.permute.xlu0 %547
  %549 = vrot.lane.b32.xlu0 %v494, 2
  %v550 = vpop.permute.xlu0 %549
  %551 = vrot.lane.b32.xlu0 %v496, 2
  %v552 = vpop.permute.xlu0 %551
  %569 = vrot.lane.b32.xlu0 %v498, 4
  %v570 = vpop.permute.xlu0 %569
  %571 = vrot.lane.b32.xlu0 %v500, 4
  %v572 = vpop.permute.xlu0 %571
  %573 = vrot.lane.b32.xlu0 %v502, 4
  %v574 = vpop.permute.xlu0 %573
  %575 = vrot.lane.b32.xlu0 %v504, 4
  %v576 = vpop.permute.xlu0 %575
  %577 = vrot.lane.b32.xlu0 %v506, 4
  %v578 = vpop.permute.xlu0 %577
  %579 = vrot.lane.b32.xlu0 %v508, 4
  %v580 = vpop.permute.xlu0 %579
  %581 = vrot.lane.b32.xlu0 %v510, 4
  %v582 = vpop.permute.xlu0 %581
  %583 = vrot.lane.b32.xlu0 %v512, 4
  %v584 = vpop.permute.xlu0 %583
  %601 = vrot.lane.b32.xlu0 %v514, 6
  %v602 = vpop.permute.xlu0 %601
  %603 = vrot.lane.b32.xlu0 %v516, 6
  %v604 = vpop.permute.xlu0 %603
  %605 = vrot.lane.b32.xlu0 %v518, 6
  %v606 = vpop.permute.xlu0 %605
  %607 = vrot.lane.b32.xlu0 %v520, 6
  %v608 = vpop.permute.xlu0 %607
  %609 = vrot.lane.b32.xlu0 %v522, 6
  %v610 = vpop.permute.xlu0 %609
  %611 = vrot.lane.b32.xlu0 %v524, 6
  %v612 = vpop.permute.xlu0 %611
  %613 = vrot.lane.b32.xlu0 %v526, 6
  %v614 = vpop.permute.xlu0 %613
  %615 = vrot.lane.b32.xlu0 %v528, 6
  %v616 = vpop.permute.xlu0 %615
  %v625 = vsel %vm445, %v466, %v538
  %v626 = vsel %vm445, %v468, %v540
  %v627 = vsel %vm445, %v470, %v542
  %v628 = vsel %vm445, %v472, %v544
  %v629 = vsel %vm445, %v474, %v546
  %v630 = vsel %vm445, %v476, %v548
  %v631 = vsel %vm445, %v478, %v550
  %v632 = vsel %vm445, %v480, %v552
  %vm633 = vcmask 31744
  %v634 = vsel %vm633, %v625, %v570
  %v635 = vsel %vm633, %v626, %v572
  %v636 = vsel %vm633, %v627, %v574
  %v637 = vsel %vm633, %v628, %v576
  %v638 = vsel %vm633, %v629, %v578
  %v639 = vsel %vm633, %v630, %v580
  %v640 = vsel %vm633, %v631, %v582
  %v641 = vsel %vm633, %v632, %v584
  %vm642 = vcmask 48128
  %v643 = vsel %vm642, %v634, %v602
  %v644 = vsel %vm642, %v635, %v604
  %v645 = vsel %vm642, %v636, %v606
  %v646 = vsel %vm642, %v637, %v608
  %v647 = vsel %vm642, %v638, %v610
  %v648 = vsel %vm642, %v639, %v612
  %v649 = vsel %vm642, %v640, %v614
  %v650 = vsel %vm642, %v641, %v616
  %v651 = vlaneseq
  %v652 = vshrl.u32 %v651, 7
  %v653 = vsub.s32 0, %v652
  %v654 = vrot.slane %v465, %v653
  %vm655 = vcmask 64512
  %v657 = vsel %vm655, %v643, 0
  %v660 = vsel %vm655, %v644, 0
  %v663 = vsel %vm655, %v645, 0
  %v666 = vsel %vm655, %v646, 0
  %v669 = vsel %vm655, %v647, 0
  %v672 = vsel %vm655, %v648, 0
  %v675 = vsel %vm655, %v649, 0
  %v678 = vsel %vm655, %v650, 0
  %680 = vmatprep.subr.mxu0 0.0
  %681 = vmatpush1.msra.mxu0 %v464
  %682 = vmatprep.subr.mxu0 0.0
  %683 = vmatpush1.msra.mxu0 0.0
  %684 = vmatprep.subr.mxu0 0.0
  %685 = vmatpush1.msra.mxu0 0.0
  %686 = vmatprep.subr.mxu0 0.0
  %687 = vmatpush1.msra.mxu0 0.0
  %688 = vmatprep.subr.mxu0 0.0
  %689 = vmatpush1.msra.mxu0 0.0
  %690 = vmatprep.subr.mxu0 0.0
  %691 = vmatpush1.msra.mxu0 0.0
  %692 = vmatprep.subr.mxu0 0.0
  %693 = vmatpush1.msra.mxu0 0.0
  %694 = vmatprep.subr.mxu0 0.0
  %695 = vmatpush1.msra.mxu0 0.0
  %696 = vmatprep.subr.mxu0 0.0
  %697 = vmatpush1.msra.mxu0 0.0
  %698 = vmatprep.subr.mxu0 0.0
  %699 = vmatpush1.msra.mxu0 0.0
  %700 = vmatprep.subr.mxu0 0.0
  %701 = vmatpush1.msra.mxu0 0.0
  %702 = vmatprep.subr.mxu0 0.0
  %703 = vmatpush1.msra.mxu0 0.0
  %704 = vmatprep.subr.mxu0 0.0
  %705 = vmatpush1.msra.mxu0 0.0
  %706 = vmatprep.subr.mxu0 0.0
  %707 = vmatpush1.msra.mxu0 0.0
  %708 = vmatprep.subr.mxu0 0.0
  %709 = vmatpush1.msra.mxu0 0.0
  %710 = vmatprep.subr.mxu0 0.0
  %711 = vmatpush1.msra.mxu0 0.0
  %712 = vmatprep.subr.mxu0 0.0
  %713 = vmatpush1.msra.mxu0 0.0
  %714 = vmatprep.subr.mxu0 0.0
  %715 = vmatpush1.msra.mxu0 0.0
  %716 = vmatprep.subr.mxu0 0.0
  %717 = vmatpush1.msra.mxu0 0.0
  %718 = vmatprep.subr.mxu0 0.0
  %719 = vmatpush1.msra.mxu0 0.0
  %720 = vmatprep.subr.mxu0 0.0
  %721 = vmatpush1.msra.mxu0 0.0
  %722 = vmatprep.subr.mxu0 0.0
  %723 = vmatpush1.msra.mxu0 0.0
  %724 = vmatprep.subr.mxu0 0.0
  %725 = vmatpush1.msra.mxu0 0.0
  %726 = vmatprep.subr.mxu0 0.0
  %727 = vmatpush1.msra.mxu0 0.0
  %728 = vmatprep.subr.mxu0 0.0
  %729 = vmatpush1.msra.mxu0 0.0
  %730 = vmatprep.subr.mxu0 0.0
  %731 = vmatpush1.msra.mxu0 0.0
  %732 = vmatprep.subr.mxu0 0.0
  %733 = vmatpush1.msra.mxu0 0.0
  %734 = vmatprep.subr.mxu0 0.0
  %735 = vmatpush1.msra.mxu0 0.0
  %736 = vmatprep.subr.mxu0 0.0
  %737 = vmatpush1.msra.mxu0 0.0
  %738 = vmatprep.subr.mxu0 0.0
  %739 = vmatpush1.msra.mxu0 0.0
  %740 = vmatprep.subr.mxu0 0.0
  %741 = vmatpush1.msra.mxu0 0.0
  %742 = vmatprep.subr.mxu0 0.0
  %743 = vmatpush1.msra.mxu0 0.0
  %744 = vmatprep.mubr.f32.mxu0 0.0
  %745 = vmatmul.mubr.f32.gmra.mrb[0].mxu0 %v657
  %v746 = vpop.f32.mrb[0].mxu0
  %v747 = vadd.f32 %v654, %v746
  %v748 = vpop.f32.mrb[0].mxu0
  %749 = vmatprep.mubr.f32.mxu0 0.0
  %750 = vmatmul.mubr.f32.gmra.mrb[0].mxu0 %v660
  %v751 = vpop.f32.mrb[0].mxu0
  %v752 = vadd.f32 %v654, %v751
  %v753 = vpop.f32.mrb[0].mxu0
  %754 = vmatprep.mubr.f32.mxu0 0.0
  %755 = vmatmul.mubr.f32.gmra.mrb[0].mxu0 %v663
  %v756 = vpop.f32.mrb[0].mxu0
  %v757 = vadd.f32 %v654, %v756
  %v758 = vpop.f32.mrb[0].mxu0
  %759 = vmatprep.mubr.f32.mxu0 0.0
  %760 = vmatmul.mubr.f32.gmra.mrb[0].mxu0 %v666
  %v761 = vpop.f32.mrb[0].mxu0
  %v762 = vadd.f32 %v654, %v761
  %v763 = vpop.f32.mrb[0].mxu0
  %764 = vmatprep.mubr.f32.mxu0 0.0
  %765 = vmatmul.mubr.f32.gmra.mrb[0].mxu0 %v669
  %v766 = vpop.f32.mrb[0].mxu0
  %v767 = vadd.f32 %v654, %v766
  %v768 = vpop.f32.mrb[0].mxu0
  %769 = vmatprep.mubr.f32.mxu0 0.0
  %770 = vmatmul.mubr.f32.gmra.mrb[0].mxu0 %v672
  %v771 = vpop.f32.mrb[0].mxu0
  %v772 = vadd.f32 %v654, %v771
  %v773 = vpop.f32.mrb[0].mxu0
  %774 = vmatprep.mubr.f32.mxu0 0.0
  %775 = vmatmul.mubr.f32.gmra.mrb[0].mxu0 %v675
  %v776 = vpop.f32.mrb[0].mxu0
  %v777 = vadd.f32 %v654, %v776
  %v778 = vpop.f32.mrb[0].mxu0
  %779 = vmatprep.mubr.f32.mxu0 0.0
  %780 = vmatmul.mubr.f32.gmra.mrb[0].mxu0 %v678
  %v781 = vpop.f32.mrb[0].mxu0
  %v782 = vadd.f32 %v654, %v781
  %v783 = vpop.f32.mrb[0].mxu0
  %784 = vdwg.mxu0
  %v785 = vmax.f32 %v747, 0.0
  %v786 = vmax.f32 %v752, 0.0
  %v787 = vmax.f32 %v757, 0.0
  %v788 = vmax.f32 %v762, 0.0
  %v789 = vmax.f32 %v767, 0.0
  %v790 = vmax.f32 %v772, 0.0
  %v791 = vmax.f32 %v777, 0.0
  %v792 = vmax.f32 %v782, 0.0
  %vm793 = vcmask 261120
  %794 = vst.msk [vmem:[#allocation3] sm:$0xff] %vm793, 0.0
  %795 = vst.msk [vmem:[#allocation3 + $0x8] sm:$0xff] %vm793, 0.0
  %796 = vst.msk [vmem:[#allocation3 + $0x10] sm:$0xff] %vm793, 0.0
  %797 = vst.msk [vmem:[#allocation3 + $0x18] sm:$0xff] %vm793, 0.0
  %798 = vst.msk [vmem:[#allocation3 + $0x20] sm:$0xff] %vm793, 0.0
  %799 = vst.msk [vmem:[#allocation3 + $0x28] sm:$0xff] %vm793, 0.0
  %800 = vst.msk [vmem:[#allocation3 + $0x30] sm:$0xff] %vm793, 0.0
  %801 = vst.msk [vmem:[#allocation3 + $0x38] sm:$0xff] %vm793, 0.0
  %802 = vst.msk [vmem:[#allocation3 + $0x40] sm:$0xff] %vm793, 0.0
  %803 = vst.msk [vmem:[#allocation3 + $0x48] sm:$0xff] %vm793, 0.0
  %804 = vst.msk [vmem:[#allocation3 + $0x8] sm:$0xff] %vm793, %v785
  %805 = vst.msk [vmem:[#allocation3 + $0x10] sm:$0xff] %vm793, %v786
  %806 = vst.msk [vmem:[#allocation3 + $0x18] sm:$0xff] %vm793, %v787
  %807 = vst.msk [vmem:[#allocation3 + $0x20] sm:$0xff] %vm793, %v788
  %808 = vst.msk [vmem:[#allocation3 + $0x28] sm:$0xff] %vm793, %v789
  %809 = vst.msk [vmem:[#allocation3 + $0x30] sm:$0xff] %vm793, %v790
  %810 = vst.msk [vmem:[#allocation3 + $0x38] sm:$0xff] %vm793, %v791
  %811 = vst.msk [vmem:[#allocation3 + $0x40] sm:$0xff] %vm793, %v792
  %v812 = vld [vmem:[%s1 + $0x10] sm:$0xff]
  %v813 = vld [vmem:[%s1 + $0x18] sm:$0xff]
  %v814 = vld [vmem:[%s1 + $0x20] sm:$0xff]
  %v815 = vld [vmem:[%s1 + $0x28] sm:$0xff]
  %v816 = vld [vmem:[%s1 + $0x30] sm:$0xff]
  %v817 = vld [vmem:[%s1 + $0x38] sm:$0xff]
  %v818 = vld [vmem:[%s1 + $0x40] sm:$0xff]
  %v819 = vld [vmem:[%s1 + $0x48] sm:$0xff]
  %v820 = vld [vmem:[%s1 + $0x50] sm:$0xff]
  %v821 = vld [vmem:[%s1 + $0x58] sm:$0xff]
  %v822 = vld [vmem:[%s1 + $0x60] sm:$0xff]
  %v823 = vld [vmem:[%s1 + $0x68] sm:$0xff]
  %v824 = vld [vmem:[%s1 + $0x70] sm:$0xff]
  %v825 = vld [vmem:[%s1 + $0x78] sm:$0xff]
  %v826 = vld [vmem:[%s1 + $0x80] sm:$0xff]
  %v827 = vld [vmem:[%s1 + $0x88] sm:$0xff]
  %v828 = vld [vmem:[%s1 + $0x90] sm:$0x1]
  %s829 = scalar_lea.vmem [#allocation3], 7
  %v830 = vld [vmem:[%s829] ss:$2 sm:$0xff]
  %s831 = scalar_lea.vmem [#allocation3], 23
  %v832 = vld [vmem:[%s831] ss:$2 sm:$0xff]
  %s833 = scalar_lea.vmem [#allocation3], 39
  %v834 = vld [vmem:[%s833] ss:$2 sm:$0xff]
  %s835 = scalar_lea.vmem [#allocation3], 55
  %v836 = vld [vmem:[%s835] ss:$2 sm:$0xff]
  %s837 = scalar_lea.vmem [#allocation3], 8
  %v838 = vld [vmem:[%s837] ss:$2 sm:$0xff]
  %s839 = scalar_lea.vmem [#allocation3], 24
  %v840 = vld [vmem:[%s839] ss:$2 sm:$0xff]
  %s841 = scalar_lea.vmem [#allocation3], 40
  %v842 = vld [vmem:[%s841] ss:$2 sm:$0xff]
  %s843 = scalar_lea.vmem [#allocation3], 56
  %v844 = vld [vmem:[%s843] ss:$2 sm:$0xff]
  %s845 = scalar_lea.vmem [#allocation3], 9
  %v846 = vld [vmem:[%s845] ss:$2 sm:$0xff]
  %s847 = scalar_lea.vmem [#allocation3], 25
  %v848 = vld [vmem:[%s847] ss:$2 sm:$0xff]
  %s849 = scalar_lea.vmem [#allocation3], 41
  %v850 = vld [vmem:[%s849] ss:$2 sm:$0xff]
  %s851 = scalar_lea.vmem [#allocation3], 57
  %v852 = vld [vmem:[%s851] ss:$2 sm:$0xff]
  %s853 = scalar_lea.vmem [#allocation3], 10
  %v854 = vld [vmem:[%s853] ss:$2 sm:$0xff]
  %s855 = scalar_lea.vmem [#allocation3], 26
  %v856 = vld [vmem:[%s855] ss:$2 sm:$0xff]
  %s857 = scalar_lea.vmem [#allocation3], 42
  %v858 = vld [vmem:[%s857] ss:$2 sm:$0xff]
  %s859 = scalar_lea.vmem [#allocation3], 58
  %v860 = vld [vmem:[%s859] ss:$2 sm:$0xff]
  %865 = vrot.lane.b32.xlu0 %v838, 32
  %v866 = vpop.permute.xlu0 %865
  %867 = vrot.lane.b32.xlu0 %v840, 32
  %v868 = vpop.permute.xlu0 %867
  %869 = vrot.lane.b32.xlu0 %v842, 32
  %v870 = vpop.permute.xlu0 %869
  %871 = vrot.lane.b32.xlu0 %v844, 32
  %v872 = vpop.permute.xlu0 %871
  %881 = vrot.lane.b32.xlu0 %v846, 64
  %v882 = vpop.permute.xlu0 %881
  %883 = vrot.lane.b32.xlu0 %v848, 64
  %v884 = vpop.permute.xlu0 %883
  %885 = vrot.lane.b32.xlu0 %v850, 64
  %v886 = vpop.permute.xlu0 %885
  %887 = vrot.lane.b32.xlu0 %v852, 64
  %v888 = vpop.permute.xlu0 %887
  %897 = vrot.lane.b32.xlu0 %v854, 96
  %v898 = vpop.permute.xlu0 %897
  %899 = vrot.lane.b32.xlu0 %v856, 96
  %v900 = vpop.permute.xlu0 %899
  %901 = vrot.lane.b32.xlu0 %v858, 96
  %v902 = vpop.permute.xlu0 %901
  %903 = vrot.lane.b32.xlu0 %v860, 96
  %v904 = vpop.permute.xlu0 %903
  %v909 = vsel %vm793, %v830, %v866
  %v910 = vsel %vm793, %v832, %v868
  %v911 = vsel %vm793, %v834, %v870
  %v912 = vsel %vm793, %v836, %v872
  %vm913 = vcmask 523264
  %v914 = vsel %vm913, %v909, %v882
  %v915 = vsel %vm913, %v910, %v884
  %v916 = vsel %vm913, %v911, %v886
  %v917 = vsel %vm913, %v912, %v888
  %vm918 = vcmask 785408
  %v919 = vsel %vm918, %v914, %v898
  %v920 = vsel %vm918, %v915, %v900
  %v921 = vsel %vm918, %v916, %v902
  %v922 = vsel %vm918, %v917, %v904
  %v923 = vlaneseq
  %v924 = vshrl.u32 %v923, 7
  %v925 = vsub.s32 0, %v924
  %v926 = vrot.slane %v828, %v925
  %927 = vmatprep.subr.mxu0 0.0
  %928 = vmatpush1.msra.mxu0 %v812
  %929 = vmatprep.subr.mxu0 0.0
  %930 = vmatpush1.msra.mxu0 %v813
  %931 = vmatprep.subr.mxu0 0.0
  %932 = vmatpush1.msra.mxu0 %v814
  %933 = vmatprep.subr.mxu0 0.0
  %934 = vmatpush1.msra.mxu0 %v815
  %935 = vmatprep.subr.mxu0 0.0
  %936 = vmatpush1.msra.mxu0 %v816
  %937 = vmatprep.subr.mxu0 0.0
  %938 = vmatpush1.msra.mxu0 %v817
  %939 = vmatprep.subr.mxu0 0.0
  %940 = vmatpush1.msra.mxu0 %v818
  %941 = vmatprep.subr.mxu0 0.0
  %942 = vmatpush1.msra.mxu0 %v819
  %943 = vmatprep.subr.mxu0 0.0
  %944 = vmatpush1.msra.mxu0 %v820
  %945 = vmatprep.subr.mxu0 0.0
  %946 = vmatpush1.msra.mxu0 %v821
  %947 = vmatprep.subr.mxu0 0.0
  %948 = vmatpush1.msra.mxu0 %v822
  %949 = vmatprep.subr.mxu0 0.0
  %950 = vmatpush1.msra.mxu0 %v823
  %951 = vmatprep.subr.mxu0 0.0
  %952 = vmatpush1.msra.mxu0 %v824
  %953 = vmatprep.subr.mxu0 0.0
  %954 = vmatpush1.msra.mxu0 %v825
  %955 = vmatprep.subr.mxu0 0.0
  %956 = vmatpush1.msra.mxu0 %v826
  %957 = vmatprep.subr.mxu0 0.0
  %958 = vmatpush1.msra.mxu0 %v827
  %959 = vmatprep.subr.mxu0 0.0
  %960 = vmatpush1.msra.mxu0 0.0
  %961 = vmatprep.subr.mxu0 0.0
  %962 = vmatpush1.msra.mxu0 0.0
  %963 = vmatprep.subr.mxu0 0.0
  %964 = vmatpush1.msra.mxu0 0.0
  %965 = vmatprep.subr.mxu0 0.0
  %966 = vmatpush1.msra.mxu0 0.0
  %967 = vmatprep.subr.mxu0 0.0
  %968 = vmatpush1.msra.mxu0 0.0
  %969 = vmatprep.subr.mxu0 0.0
  %970 = vmatpush1.msra.mxu0 0.0
  %971 = vmatprep.subr.mxu0 0.0
  %972 = vmatpush1.msra.mxu0 0.0
  %973 = vmatprep.subr.mxu0 0.0
  %974 = vmatpush1.msra.mxu0 0.0
  %975 = vmatprep.subr.mxu0 0.0
  %976 = vmatpush1.msra.mxu0 0.0
  %977 = vmatprep.subr.mxu0 0.0
  %978 = vmatpush1.msra.mxu0 0.0
  %979 = vmatprep.subr.mxu0 0.0
  %980 = vmatpush1.msra.mxu0 0.0
  %981 = vmatprep.subr.mxu0 0.0
  %982 = vmatpush1.msra.mxu0 0.0
  %983 = vmatprep.subr.mxu0 0.0
  %984 = vmatpush1.msra.mxu0 0.0
  %985 = vmatprep.subr.mxu0 0.0
  %986 = vmatpush1.msra.mxu0 0.0
  %987 = vmatprep.subr.mxu0 0.0
  %988 = vmatpush1.msra.mxu0 0.0
  %989 = vmatprep.subr.mxu0 0.0
  %990 = vmatpush1.msra.mxu0 0.0
  %991 = vmatprep.mubr.f32.mxu0 0.0
  %992 = vmatmul.mubr.f32.gmra.mrb[0].mxu0 %v919
  %v993 = vpop.f32.mrb[0].mxu0
  %v994 = vadd.f32 %v926, %v993
  %v995 = vpop.f32.mrb[0].mxu0
  %996 = vmatprep.mubr.f32.mxu0 0.0
  %997 = vmatmul.mubr.f32.gmra.mrb[0].mxu0 %v920
  %v998 = vpop.f32.mrb[0].mxu0
  %v999 = vadd.f32 %v926, %v998
  %v1000 = vpop.f32.mrb[0].mxu0
  %1001 = vmatprep.mubr.f32.mxu0 0.0
  %1002 = vmatmul.mubr.f32.gmra.mrb[0].mxu0 %v921
  %v1003 = vpop.f32.mrb[0].mxu0
  %v1004 = vadd.f32 %v926, %v1003
  %v1005 = vpop.f32.mrb[0].mxu0
  %1006 = vmatprep.mubr.f32.mxu0 0.0
  %1007 = vmatmul.mubr.f32.gmra.mrb[0].mxu0 %v922
  %v1008 = vpop.f32.mrb[0].mxu0
  %v1009 = vadd.f32 %v926, %v1008
  %v1010 = vpop.f32.mrb[0].mxu0
  %1011 = vdwg.mxu0
  %v1012 = vmax.f32 %v994, 0.0
  %v1013 = vmax.f32 %v999, 0.0
  %v1014 = vmax.f32 %v1004, 0.0
  %v1015 = vmax.f32 %v1009, 0.0
  %v1016 = vld [vmem:[%s1 + $0x98] sm:$0xff]
  %v1017 = vld [vmem:[%s1 + $0xa0] sm:$0xff]
  %v1018 = vld [vmem:[%s1 + $0xa8] sm:$0xff]
  %v1019 = vld [vmem:[%s1 + $0xb0] sm:$0xff]
  %v1020 = vld [vmem:[%s1 + $0xb8] sm:$0x1]
  %v1021 = vlaneseq
  %v1022 = vshrl.u32 %v1021, 7
  %v1023 = vsub.s32 0, %v1022
  %v1024 = vrot.slane %v1020, %v1023
  %v1026 = vsel %vm793, %v1012, 0
  %v1029 = vsel %vm793, %v1013, 0
  %v1032 = vsel %vm793, %v1014, 0
  %v1035 = vsel %vm793, %v1015, 0
  %1037 = vmatprep.subr.mxu0 0.0
  %1038 = vmatpush1.msra.mxu0 %v1016
  %1039 = vmatprep.subr.mxu0 0.0
  %1040 = vmatpush1.msra.mxu0 %v1017
  %1041 = vmatprep.subr.mxu0 0.0
  %1042 = vmatpush1.msra.mxu0 %v1018
  %1043 = vmatprep.subr.mxu0 0.0
  %1044 = vmatpush1.msra.mxu0 %v1019
  %1045 = vmatprep.subr.mxu0 0.0
  %1046 = vmatpush1.msra.mxu0 0.0
  %1047 = vmatprep.subr.mxu0 0.0
  %1048 = vmatpush1.msra.mxu0 0.0
  %1049 = vmatprep.subr.mxu0 0.0
  %1050 = vmatpush1.msra.mxu0 0.0
  %1051 = vmatprep.subr.mxu0 0.0
  %1052 = vmatpush1.msra.mxu0 0.0
  %1053 = vmatprep.subr.mxu0 0.0
  %1054 = vmatpush1.msra.mxu0 0.0
  %1055 = vmatprep.subr.mxu0 0.0
  %1056 = vmatpush1.msra.mxu0 0.0
  %1057 = vmatprep.subr.mxu0 0.0
  %1058 = vmatpush1.msra.mxu0 0.0
  %1059 = vmatprep.subr.mxu0 0.0
  %1060 = vmatpush1.msra.mxu0 0.0
  %1061 = vmatprep.subr.mxu0 0.0
  %1062 = vmatpush1.msra.mxu0 0.0
  %1063 = vmatprep.subr.mxu0 0.0
  %1064 = vmatpush1.msra.mxu0 0.0
  %1065 = vmatprep.subr.mxu0 0.0
  %1066 = vmatpush1.msra.mxu0 0.0
  %1067 = vmatprep.subr.mxu0 0.0
  %1068 = vmatpush1.msra.mxu0 0.0
  %1069 = vmatprep.subr.mxu0 0.0
  %1070 = vmatpush1.msra.mxu0 0.0
  %1071 = vmatprep.subr.mxu0 0.0
  %1072 = vmatpush1.msra.mxu0 0.0
  %1073 = vmatprep.subr.mxu0 0.0
  %1074 = vmatpush1.msra.mxu0 0.0
  %1075 = vmatprep.subr.mxu0 0.0
  %1076 = vmatpush1.msra.mxu0 0.0
  %1077 = vmatprep.subr.mxu0 0.0
  %1078 = vmatpush1.msra.mxu0 0.0
  %1079 = vmatprep.subr.mxu0 0.0
  %1080 = vmatpush1.msra.mxu0 0.0
  %1081 = vmatprep.subr.mxu0 0.0
  %1082 = vmatpush1.msra.mxu0 0.0
  %1083 = vmatprep.subr.mxu0 0.0
  %1084 = vmatpush1.msra.mxu0 0.0
  %1085 = vmatprep.subr.mxu0 0.0
  %1086 = vmatpush1.msra.mxu0 0.0
  %1087 = vmatprep.subr.mxu0 0.0
  %1088 = vmatpush1.msra.mxu0 0.0
  %1089 = vmatprep.subr.mxu0 0.0
  %1090 = vmatpush1.msra.mxu0 0.0
  %1091 = vmatprep.subr.mxu0 0.0
  %1092 = vmatpush1.msra.mxu0 0.0
  %1093 = vmatprep.subr.mxu0 0.0
  %1094 = vmatpush1.msra.mxu0 0.0
  %1095 = vmatprep.subr.mxu0 0.0
  %1096 = vmatpush1.msra.mxu0 0.0
  %1097 = vmatprep.subr.mxu0 0.0
  %1098 = vmatpush1.msra.mxu0 0.0
  %1099 = vmatprep.subr.mxu0 0.0
  %1100 = vmatpush1.msra.mxu0 0.0
  %1101 = vmatprep.mubr.f32.mxu0 0.0
  %1102 = vmatmul.mubr.f32.gmra.mrb[0].mxu0 %v1026
  %v1103 = vpop.f32.mrb[0].mxu0
  %v1104 = vadd.f32 %v1024, %v1103
  %v1105 = vpop.f32.mrb[0].mxu0
  %1106 = vmatprep.mubr.f32.mxu0 0.0
  %1107 = vmatmul.mubr.f32.gmra.mrb[0].mxu0 %v1029
  %v1108 = vpop.f32.mrb[0].mxu0
  %v1109 = vadd.f32 %v1024, %v1108
  %v1110 = vpop.f32.mrb[0].mxu0
  %1111 = vmatprep.mubr.f32.mxu0 0.0
  %1112 = vmatmul.mubr.f32.gmra.mrb[0].mxu0 %v1032
  %v1113 = vpop.f32.mrb[0].mxu0
  %v1114 = vadd.f32 %v1024, %v1113
  %v1115 = vpop.f32.mrb[0].mxu0
  %1116 = vmatprep.mubr.f32.mxu0 0.0
  %1117 = vmatmul.mubr.f32.gmra.mrb[0].mxu0 %v1035
  %v1118 = vpop.f32.mrb[0].mxu0
  %v1119 = vadd.f32 %v1024, %v1118
  %v1120 = vpop.f32.mrb[0].mxu0
  %1121 = vdwg.mxu0
  %v1122 = vsel %vm913, %v1104, inf
  %1123 = vmin.xlane.f32.xlu0 %v1122
  %v1124 = vpop.xlane.xlu0 %1123
  %v1125 = vsel %vm913, %v1109, inf
  %1126 = vmin.xlane.f32.xlu0 %v1125
  %v1127 = vpop.xlane.xlu0 %1126
  %v1128 = vsel %vm913, %v1114, inf
  %1129 = vmin.xlane.f32.xlu0 %v1128
  %v1130 = vpop.xlane.xlu0 %1129
  %v1131 = vsel %vm913, %v1119, inf
  %1132 = vmin.xlane.f32.xlu0 %v1131
  %v1133 = vpop.xlane.xlu0 %1132
  %vm1134 = vcmp.le.f32.partialorder %v1104, %v1124
  %vm1135 = vcmp.le.f32.partialorder %v1109, %v1127
  %vm1136 = vcmp.le.f32.partialorder %v1114, %v1130
  %vm1137 = vcmp.le.f32.partialorder %v1119, %v1133
  %v1138 = vsel %vm1134, %v391, 1073741824
  %v1139 = vsel %vm1135, %v391, 1073741824
  %v1140 = vsel %vm1136, %v391, 1073741824
  %v1141 = vsel %vm1137, %v391, 1073741824
  %v1142 = vsel %vm913, %v1138, 2147483647
  %v1143 = vand.u32 %v1142, 65535
  %v1144 = vshra.s32 %v1142, 16
  %v1145 = vcvt.s32.f32 %v1143
  %v1146 = vcvt.s32.f32 %v1144
  %1147 = vmin.xlane.f32.xlu0 %v1146
  %v1148 = vpop.xlane.xlu0 %1147
  %vm1149 = vcmp.eq.f32.partialorder %v1146, %v1148
  %v1150 = vsel %vm1149, %v1145, inf
  %1151 = vmin.xlane.f32.xlu0 %v1150
  %v1152 = vpop.xlane.xlu0 %1151
  %v1153 = vcvt.f32.s32 %v1152
  %v1154 = vcvt.f32.s32 %v1148
  %v1155 = vshll.u32 %v1154, 16
  %v1156 = vadd.s32 %v1155, %v1153
  %v1157 = vsel %vm913, %v1139, 2147483647
  %v1158 = vand.u32 %v1157, 65535
  %v1159 = vshra.s32 %v1157, 16
  %v1160 = vcvt.s32.f32 %v1158
  %v1161 = vcvt.s32.f32 %v1159
  %1162 = vmin.xlane.f32.xlu0 %v1161
  %v1163 = vpop.xlane.xlu0 %1162
  %vm1164 = vcmp.eq.f32.partialorder %v1161, %v1163
  %v1165 = vsel %vm1164, %v1160, inf
  %1166 = vmin.xlane.f32.xlu0 %v1165
  %v1167 = vpop.xlane.xlu0 %1166
  %v1168 = vcvt.f32.s32 %v1167
  %v1169 = vcvt.f32.s32 %v1163
  %v1170 = vshll.u32 %v1169, 16
  %v1171 = vadd.s32 %v1170, %v1168
  %v1172 = vsel %vm913, %v1140, 2147483647
  %v1173 = vand.u32 %v1172, 65535
  %v1174 = vshra.s32 %v1172, 16
  %v1175 = vcvt.s32.f32 %v1173
  %v1176 = vcvt.s32.f32 %v1174
  %1177 = vmin.xlane.f32.xlu0 %v1176
  %v1178 = vpop.xlane.xlu0 %1177
  %vm1179 = vcmp.eq.f32.partialorder %v1176, %v1178
  %v1180 = vsel %vm1179, %v1175, inf
  %1181 = vmin.xlane.f32.xlu0 %v1180
  %v1182 = vpop.xlane.xlu0 %1181
  %v1183 = vcvt.f32.s32 %v1182
  %v1184 = vcvt.f32.s32 %v1178
  %v1185 = vshll.u32 %v1184, 16
  %v1186 = vadd.s32 %v1185, %v1183
  %v1187 = vsel %vm913, %v1141, 2147483647
  %v1188 = vand.u32 %v1187, 65535
  %v1189 = vshra.s32 %v1187, 16
  %v1190 = vcvt.s32.f32 %v1188
  %v1191 = vcvt.s32.f32 %v1189
  %1192 = vmin.xlane.f32.xlu0 %v1191
  %v1193 = vpop.xlane.xlu0 %1192
  %vm1194 = vcmp.eq.f32.partialorder %v1191, %v1193
  %v1195 = vsel %vm1194, %v1190, inf
  %1196 = vmin.xlane.f32.xlu0 %v1195
  %v1197 = vpop.xlane.xlu0 %1196
  %v1198 = vcvt.f32.s32 %v1197
  %v1199 = vcvt.f32.s32 %v1193
  %v1200 = vshll.u32 %v1199, 16
  %v1201 = vadd.s32 %v1200, %v1198
  %1202 = vst.msk [vmem:[%s2] sm:$0xff] %vm147, %v1156
  %1203 = vst.msk [vmem:[%s2 + $0x8] sm:$0xff] %vm147, %v1171
  %1204 = vst.msk [vmem:[%s2 + $0x10] sm:$0xff] %vm147, %v1186
  %1205 = vst.msk [vmem:[%s2 + $0x18] sm:$0xff] %vm147, %v1201
  // Predicated region
  $region10: #{f0_tokenizer_forward.1} parent=0 // pred_check
    _
  $region11: #{f0_tokenizer_forward.1} parent=0 // pred_check_branch
    %1207 = sbr.rel (0) target = $region13
  $region12: #{f0_tokenizer_forward.1} parent=0 // pred_region
    _
  $region13: #{f0_tokenizer_forward.1} parent=0 // pred_fallthru
    _
  // Predicated region
  $region14: #{f0_tokenizer_forward.1} parent=0 // pred_check
    _
  $region15: #{f0_tokenizer_forward.1} parent=0 // pred_check_branch
    %1209 = sbr.rel (0) target = $region17
  $region16: #{f0_tokenizer_forward.1} parent=0 // pred_region
    _
  $region17: #{f0_tokenizer_forward.1} parent=0 // pred_fallthru
    _

</llo_original>
